<compile_context>
chip_gen: v7x
topology: tpu7x:2x2x1
jax: 0.10.0
libtpu: 0.0.40
codegen_flags: <defaults>
</compile_context>

<pallas_src>
import functools

import jax
import jax.numpy as jnp
from jax.experimental import pallas as pl
from jax.experimental.pallas import tpu as pltpu


def _round_up(x, m):
    return (x + m - 1) // m * m


def _cdiv(a, b):
    return (a + b - 1) // b


def _vmem_capacity_bytes():
    try:
        return int(pltpu.get_tpu_info().vmem_capacity_bytes)
    except Exception:
        return 64 << 20  # conservative (v7x per-TensorCore VMEM)


def _linear_kernel(x_ref, w_ref, b_ref, o_ref, *, cdt):
    # x_ref: (tm, K)   w_ref: (K, tn)   b_ref: (1, tn) f32   o_ref: (tm, tn)
    x = x_ref[...]
    if x.dtype != cdt:
        # Cast the activation tile on-chip instead of in the wrapper: avoids a
        # whole extra HBM read+write pass over the activations.
        x = x.astype(cdt)
    acc = jnp.dot(x, w_ref[...], preferred_element_type=jnp.float32)
    o_ref[...] = (acc + b_ref[...]).astype(o_ref.dtype)


@functools.partial(
    jax.jit,
    static_argnames=("tm", "tn", "compute_dtype", "xla_small_fallback"),
)
def projection_layer(x, w_t, b, *, tm=1024, tn=512, compute_dtype=None,
                     xla_small_fallback=True):
    """y = x @ w_t + b, matching torch.nn.Linear(clip_dim, phi_dim).

    x:   (..., clip_dim)
    w_t: (clip_dim, phi_dim)   (transpose of PyTorch's weight)
    b:   (phi_dim,)
    compute_dtype: optional dtype (e.g. jnp.bfloat16) for the MXU operands;
        accumulation and the bias add stay f32, output follows x.dtype.
    """
    orig_shape = x.shape
    K = orig_shape[-1]
    N = w_t.shape[-1]
    out_dtype = x.dtype

    x2 = x.reshape(-1, K)
    M = x2.shape[0]

    # Deterministic MXU input dtype: both operands end up as `cdt`.
    if compute_dtype is not None:
        cdt = jnp.dtype(compute_dtype)
    else:
        cdt = jnp.promote_types(x.dtype, w_t.dtype)

    # Tiny problems: the fixed pallas_call cost dominates (and is paid per
    # TensorCore on v7x); let XLA fuse it.
    if xla_small_fallback and M * K * N < (2 << 20):
        y = jnp.dot(x2.astype(cdt), w_t.astype(cdt),
                    preferred_element_type=jnp.float32)
        y = (y + b.astype(jnp.float32)).astype(out_dtype)
        return y.reshape(*orig_shape[:-1], N)

    # Weight / bias casts happen once in the wrapper (amortized, cacheable);
    # the activation cast (if any) happens tile-by-tile inside the kernel.
    w2 = w_t.astype(cdt) if w_t.dtype != cdt else w_t
    b2 = b.astype(jnp.float32).reshape(1, N)

    x_bytes = jnp.dtype(x.dtype).itemsize
    w_bytes = cdt.itemsize
    out_bytes = jnp.dtype(out_dtype).itemsize

    # ---- generation-aware VMEM budget ---------------------------------------
    vmem_cap = _vmem_capacity_bytes()          # 128 MiB v5e/v6e, 64 MiB/TC v7x
    vmem_budget = int(min(100 << 20, max(32 << 20, vmem_cap - (24 << 20))))
    margin = 2 << 20                           # Mosaic internal scratch slack

    def cast_tmp(tm_):
        # f32->bf16 (or other) in-kernel activation cast temporary.
        return tm_ * K * cdt.itemsize if jnp.dtype(x.dtype) != cdt else 0

    def row_tile(tm_):
        if tm_ >= M:
            return M                           # full dim: always a legal block
        return max(8, (tm_ // 8) * 8)

    def col_tile(tn_):
        if tn_ >= N:
            return N                           # full dim: always a legal block
        return max(128, (tn_ // 128) * 128)

    flops = 2 * M * K * N

    # ---- path 1: weight fully VMEM-resident (1-D row grid) ------------------
    def resident_need(tm_):
        return (2 * tm_ * K * x_bytes          # x row tiles (double-buffered)
                + 2 * K * N * w_bytes          # weight (constant block index,
                                               #   2 buffers still allocated)
                + 2 * N * 4                    # bias (f32)
                + 2 * tm_ * N * out_bytes      # output tiles
                + tm_ * N * 4                  # f32 matmul accumulator temp
                + cast_tmp(tm_) + margin)

    tm_res = row_tile(int(tm))
    if M >= 512:
        # v7x megacore: keep at least 2 row tiles so both TensorCores get work.
        tm_res = min(tm_res, row_tile(_round_up(_cdiv(M, 2), 8)))
    while resident_need(tm_res) > vmem_budget and tm_res > 128:
        tm_res = row_tile(max(128, tm_res // 2))

    use_resident = resident_need(tm_res) <= vmem_budget

    if use_resident:
        tm_eff = tm_res
        gm = _cdiv(M, tm_eff)
        grid = (gm,)
        in_specs = [
            pl.BlockSpec((tm_eff, K), lambda i: (i, 0)),
            # Constant block index => DMA'd once, resident across all row tiles.
            # TODO(synk): pipeline_mode=pl.Buffered(1) on these two specs would
            # drop the unused second buffer and halve the resident footprint.
            pl.BlockSpec((K, N), lambda i: (0, 0)),
            pl.BlockSpec((1, N), lambda i: (0, 0)),
        ]
        out_specs = pl.BlockSpec((tm_eff, N), lambda i: (i, 0))
        dims = ("parallel",)
        vmem_need = resident_need(tm_eff)
        bytes_accessed = (M * K * x_bytes + K * N * w_bytes + N * 4
                          + M * N * out_bytes)
    else:
        # ---- path 2: 2-D tiled. Shrink tn before tm (keep the row tile big),
        # ---- then pick the grid order that minimizes re-streamed HBM bytes.
        # TODO(synk): a K-tiled 3rd 'arbitrary' axis with an f32 VMEM
        # accumulator would keep tiles large for very large clip_dim.
        def tiled_need(tm_, tn_):
            return (2 * tm_ * K * x_bytes + 2 * K * tn_ * w_bytes
                    + 2 * tn_ * 4 + 2 * tm_ * tn_ * out_bytes
                    + tm_ * tn_ * 4 + cast_tmp(tm_) + margin)

        tn_eff = col_tile(int(tn))
        tm_eff = row_tile(int(tm))
        if M >= 512:
            tm_eff = min(tm_eff, row_tile(_round_up(_cdiv(M, 2), 8)))

        while tiled_need(tm_eff, tn_eff) > vmem_budget and tn_eff > 128:
            tn_eff = col_tile(max(128, tn_eff // 2))
        while tiled_need(tm_eff, tn_eff) > vmem_budget and tm_eff > 128:
            tm_eff = row_tile(max(128, tm_eff // 2))

        gm = _cdiv(M, tm_eff)
        gn = _cdiv(N, tn_eff)
        w_restream = (gm - 1) * K * N * w_bytes   # row-outer: weight per row tile
        x_restream = (gn - 1) * M * K * x_bytes   # col-outer: x per col tile

        if w_restream <= x_restream:
            grid = (gm, gn)
            in_specs = [
                pl.BlockSpec((tm_eff, K), lambda i, j: (i, 0)),
                pl.BlockSpec((K, tn_eff), lambda i, j: (0, j)),
                pl.BlockSpec((1, tn_eff), lambda i, j: (0, j)),
            ]
            out_specs = pl.BlockSpec((tm_eff, tn_eff), lambda i, j: (i, j))
            bytes_accessed = (M * K * x_bytes + gm * K * N * w_bytes
                              + gm * N * 4 + M * N * out_bytes)
        else:
            grid = (gn, gm)
            in_specs = [
                pl.BlockSpec((tm_eff, K), lambda j, i: (i, 0)),
                pl.BlockSpec((K, tn_eff), lambda j, i: (0, j)),
                pl.BlockSpec((1, tn_eff), lambda j, i: (0, j)),
            ]
            out_specs = pl.BlockSpec((tm_eff, tn_eff), lambda j, i: (i, j))
            bytes_accessed = (gn * M * K * x_bytes + K * N * w_bytes
                              + N * 4 + M * N * out_bytes)
        dims = ("parallel", "parallel")
        vmem_need = tiled_need(tm_eff, tn_eff)

    vmem_limit = int(min(vmem_cap - (4 << 20),
                         max(32 << 20, vmem_need + (8 << 20))))

    out = pl.pallas_call(
        functools.partial(_linear_kernel, cdt=cdt),
        out_shape=jax.ShapeDtypeStruct((M, N), out_dtype),
        grid_spec=pltpu.PrefetchScalarGridSpec(
            num_scalar_prefetch=0,
            grid=grid,
            in_specs=in_specs,
            out_specs=out_specs,
        ),
        compiler_params=pltpu.CompilerParams(
            dimension_semantics=dims,
            vmem_limit_bytes=vmem_limit,
        ),
        cost_estimate=pl.CostEstimate(
            flops=flops, transcendentals=0, bytes_accessed=int(bytes_accessed)),
    )(x2, w2, b2)

    return out.reshape(*orig_shape[:-1], N)


if __name__ == "__main__":
    clip_dim = 32
    phi_dim = 64
    batch, seq = 2, 8  # 16 rows total

    key = jax.random.PRNGKey(0)
    kx, kw, kb, kx2 = jax.random.split(key, 4)

    # Deterministic parameter init (nn.Linear-style uniform(-1/sqrt(K), 1/sqrt(K)))
    bound = 1.0 / jnp.sqrt(jnp.float32(clip_dim))
    w = jax.random.uniform(kw, (phi_dim, clip_dim), jnp.float32, -bound, bound)
    b = jax.random.uniform(kb, (phi_dim,), jnp.float32, -bound, bound)
    w_t = w.T  # (clip_dim, phi_dim) layout for the kernel

    x = jax.random.normal(kx, (batch, seq, clip_dim), jnp.float32)

    # Force the Pallas path (the wrapper would normally route a problem this
    # tiny through plain XLA to avoid the pallas_call fixed cost).
    y = projection_layer(x, w_t, b, xla_small_fallback=False)
    y = jax.block_until_ready(y)

    y_ref = x @ w.T + b
    assert y.shape == (batch, seq, phi_dim)
    assert jnp.allclose(y, y_ref, atol=1e-5, rtol=1e-5)

    # Exercise the unpadded ragged-row path (M=50 not a multiple of the row tile).
    x_ragged = jax.random.normal(kx2, (50, clip_dim), jnp.float32)
    y_rag = jax.block_until_ready(
        projection_layer(x_ragged, w_t, b, tm=16, xla_small_fallback=False))
    y_rag_ref = x_ragged @ w.T + b
    assert jnp.allclose(y_rag, y_rag_ref, atol=1e-5, rtol=1e-5)

    # Default entry point (small-problem XLA fallback enabled).
    y2 = jax.block_until_ready(projection_layer(x, w_t, b))
    assert jnp.allclose(y2, y_ref, atol=1e-5, rtol=1e-5)

    print("KERNEL_OK")
</pallas_src>

<mosaic_0001>
module attributes {stable_mosaic.version = 11 : i64} {
  func.func @_linear_kernel(%arg0: i32, %arg1: memref<16x32xf32, #tpu.memory_space<vmem>>, %arg2: memref<32x64xf32, #tpu.memory_space<vmem>>, %arg3: memref<1x64xf32, #tpu.memory_space<vmem>>, %arg4: memref<16x64xf32, #tpu.memory_space<vmem>>) attributes {dimension_semantics = [#tpu.dimension_semantics<parallel>], iteration_bounds = array<i64: 1>, scalar_prefetch = 0 : i64, scratch_operands = 0 : i64, tpu.core_type = #tpu.core_type<tc>, window_params = [{transform_indices = @transform_0, window_bounds = array<i64: 16, 32>}, {pipeline_mode = #tpu.pipeline_mode<synchronous>, transform_indices = @transform_1, window_bounds = array<i64: 32, 64>}, {pipeline_mode = #tpu.pipeline_mode<synchronous>, transform_indices = @transform_2, window_bounds = array<i64: 1, 64>}, {transform_indices = @transform_3, window_bounds = array<i64: 16, 64>}]} {
    %c0 = arith.constant 0 : index
    %c0_0 = arith.constant 0 : index
    %0 = vector.load %arg1[%c0, %c0_0] : memref<16x32xf32, #tpu.memory_space<vmem>>, vector<16x32xf32>
    %c0_1 = arith.constant 0 : index
    %c0_2 = arith.constant 0 : index
    %1 = vector.load %arg2[%c0_1, %c0_2] : memref<32x64xf32, #tpu.memory_space<vmem>>, vector<32x64xf32>
    %cst = arith.constant dense<0.000000e+00> : vector<16x64xf32>
    %2 = tpu.matmul %0, %1, %cst {dimension_numbers = #tpu.dot_dimension_numbers<[1], [0], [0], [1], [0, 0, 1, 1], [], []>} : vector<16x32xf32>, vector<32x64xf32>, vector<16x64xf32> -> vector<16x64xf32>
    %c0_3 = arith.constant 0 : index
    %c0_4 = arith.constant 0 : index
    %3 = vector.load %arg3[%c0_3, %c0_4] : memref<1x64xf32, #tpu.memory_space<vmem>>, vector<1x64xf32>
    %4 = vector.broadcast %3 : vector<1x64xf32> to vector<16x64xf32>
    %5 = arith.addf %2, %4 : vector<16x64xf32>
    %c0_5 = arith.constant 0 : index
    %c0_6 = arith.constant 0 : index
    %6 = vector.load %arg4[%c0_5, %c0_6] : memref<16x64xf32, #tpu.memory_space<vmem>>, vector<16x64xf32>
    tpu.vector_store %arg4[%c0_5, %c0_6], %5 {strides = array<i32>} : memref<16x64xf32, #tpu.memory_space<vmem>>, vector<16x64xf32>,
    return
  }
  func.func @transform_0(%arg0: i32) -> (i32, i32) {
    %c0_i32 = arith.constant 0 : i32
    %c0_i32_0 = arith.constant 0 : i32
    return %arg0, %c0_i32 : i32, i32
  }
  func.func @transform_1(%arg0: i32) -> (i32, i32) {
    %c0_i32 = arith.constant 0 : i32
    %c0_i32_0 = arith.constant 0 : i32
    %c0_i32_1 = arith.constant 0 : i32
    return %c0_i32, %c0_i32_0 : i32, i32
  }
  func.func @transform_2(%arg0: i32) -> (i32, i32) {
    %c0_i32 = arith.constant 0 : i32
    %c0_i32_0 = arith.constant 0 : i32
    %c0_i32_1 = arith.constant 0 : i32
    return %c0_i32, %c0_i32_0 : i32, i32
  }
  func.func @transform_3(%arg0: i32) -> (i32, i32) {
    %c0_i32 = arith.constant 0 : i32
    %c0_i32_0 = arith.constant 0 : i32
    return %arg0, %c0_i32 : i32, i32
  }
}

</mosaic_0001>

<llo_original>
// kernel: projection_layer.1
$region0: #{projection_layer.1}
  #allocation0 [shape = 'u32[]', space=smem, size = 0x4, offset = 0x4, fixed_abs, tag = 'smem constant byte address 0x4 - core index']
  #allocation1 [shape = 'u32[144,128]{1,0:T(1,128)}', space=vmem, size = 0x12000, scoped, tag = 'internal scratch']
  %s0 = inlined_call_operand.hbm [shape: f32[16,32], index: 0, kind: input, shape index: {}]
  %s1 = inlined_call_operand.hbm [shape: f32[32,64], index: 1, kind: input, shape index: {}]
  %s2 = inlined_call_operand.vmem [shape: f32[1,64], index: 2, kind: input, shape index: {}]
  %s3 = inlined_call_operand.hbm [shape: f32[16,64], index: 3, kind: output, shape index: {}]
  %s4 = sld [smem:[#allocation0]]
  $region30: #{projection_layer.1} parent=0
    _
  %s6 = ssub.s32 1, %s4
  %s7 = scalar_select 0, %s6, %s4
  $region1: #{projection_layer.1} parent=0
    #allocation2 [shape = 'u8[8192]{0}', space=vmem, size = 0x2000, scoped, tag = 'input window, operand 0, single buffered']
    #allocation3 [shape = 's32[1]{0}', space=sflag, size = 0x4, scoped, tag = 'scoped memory for projection_layer.1']
    #allocation4 [shape = 's32[1]{0}', space=sflag, size = 0x4, scoped, tag = 'scoped memory for projection_layer.1']
    #allocation5 [shape = 'u8[16384]{0}', space=vmem, size = 0x4000, scoped, tag = 'input window, operand 1, single buffered']
    #allocation6 [shape = 's32[1]{0}', space=sflag, size = 0x4, scoped, tag = 'scoped memory for projection_layer.1']
    #allocation7 [shape = 'u8[8192]{0}', space=vmem, size = 0x2000, scoped, tag = 'output window, operand 0, single buffered']
    %8 = vsyncpa [#allocation3], 0
    %9 = vsyncpa [#allocation6], 0
    %10 = vsyncpa [#allocation4], 0
    // Predicated region
    $region2: #{projection_layer.1} parent=1 // pred_check
      _
    $region3: #{projection_layer.1} parent=1 // pred_check_branch
      %12 = sbr.rel (0) target = $region5
    $region4: #{projection_layer.1} parent=1 // pred_region
      %s14 = ssub.s32 256, 256
      %15 = vsyncadd [#allocation3], %s14
      %s16 = sshll.u32 [#allocation2], 4
      %s17 = int_to_ptr.vmem [resolvable:$true] %s16
      %22 = dma.hbm_to_vmem [thread:$0]  %s0, 256, %s17, [#allocation3], 128, 128, 8
    $region5: #{projection_layer.1} parent=1 // pred_fallthru
      _
    // Predicated region
    $region6: #{projection_layer.1} parent=1 // pred_check
      _
    $region7: #{projection_layer.1} parent=1 // pred_check_branch
      %24 = sbr.rel (0) target = $region9
    $region8: #{projection_layer.1} parent=1 // pred_region
      %s26 = ssub.s32 512, 512
      %27 = vsyncadd [#allocation6], %s26
      %s28 = sshll.u32 [#allocation5], 4
      %s29 = int_to_ptr.vmem [resolvable:$true] %s28
      %34 = dma.hbm_to_vmem [thread:$0]  %s1, 512, %s29, [#allocation6], 128, 128, 8
    $region9: #{projection_layer.1} parent=1 // pred_fallthru
      _
    // Predicated region
    $region10: #{projection_layer.1} parent=1 // pred_check
      _
    $region11: #{projection_layer.1} parent=1 // pred_check_branch
      %36 = sbr.rel (0) target = $region13
    $region12: #{projection_layer.1} parent=1 // pred_region
      _
    $region13: #{projection_layer.1} parent=1 // pred_fallthru
      _
    // Predicated region
    $region14: #{projection_layer.1} parent=1 // pred_check
      _
    $region15: #{projection_layer.1} parent=1 // pred_check_branch
      %38 = sbr.rel (0) target = $region17
    $region16: #{projection_layer.1} parent=1 // pred_region
      %39 = dma.done [#allocation3], 256
    $region17: #{projection_layer.1} parent=1 // pred_fallthru
      _
    // Predicated region
    $region18: #{projection_layer.1} parent=1 // pred_check
      _
    $region19: #{projection_layer.1} parent=1 // pred_check_branch
      %41 = sbr.rel (0) target = $region21
    $region20: #{projection_layer.1} parent=1 // pred_region
      %42 = dma.done [#allocation6], 512
    $region21: #{projection_layer.1} parent=1 // pred_fallthru
      _
    %v43 = vld [vmem:[#allocation2] sm:$0xff]
    %v44 = vld [vmem:[#allocation2 + $0x8] sm:$0xff]
    %v45 = vld [vmem:[#allocation5] sm:$0xff]
    %v46 = vld [vmem:[#allocation5 + $0x8] sm:$0xff]
    %v47 = vld [vmem:[#allocation5 + $0x10] sm:$0xff]
    %v48 = vld [vmem:[#allocation5 + $0x18] sm:$0xff]
    %v49 = vld [vmem:[%s2] sm:$0x1]
    %v51 = vlaneseq
    %v52 = vshrl.u32 %v51, 7
    %v53 = vsub.s32 0, %v52
    %v54 = vrot.slane %v49, %v53
    %vm56 = vcmask 261120
    %v58 = vsel %vm56, %v43, 0
    %v61 = vsel %vm56, %v44, 0
    %63 = vmatprep.subr.mxu0 0.0
    %64 = vmatpush1.msra.mxu0 %v45
    %65 = vmatprep.subr.mxu0 0.0
    %66 = vmatpush1.msra.mxu0 %v46
    %67 = vmatprep.subr.mxu0 0.0
    %68 = vmatpush1.msra.mxu0 %v47
    %69 = vmatprep.subr.mxu0 0.0
    %70 = vmatpush1.msra.mxu0 %v48
    %71 = vmatprep.subr.mxu0 0.0
    %72 = vmatpush1.msra.mxu0 0.0
    %73 = vmatprep.subr.mxu0 0.0
    %74 = vmatpush1.msra.mxu0 0.0
    %75 = vmatprep.subr.mxu0 0.0
    %76 = vmatpush1.msra.mxu0 0.0
    %77 = vmatprep.subr.mxu0 0.0
    %78 = vmatpush1.msra.mxu0 0.0
    %79 = vmatprep.subr.mxu0 0.0
    %80 = vmatpush1.msra.mxu0 0.0
    %81 = vmatprep.subr.mxu0 0.0
    %82 = vmatpush1.msra.mxu0 0.0
    %83 = vmatprep.subr.mxu0 0.0
    %84 = vmatpush1.msra.mxu0 0.0
    %85 = vmatprep.subr.mxu0 0.0
    %86 = vmatpush1.msra.mxu0 0.0
    %87 = vmatprep.subr.mxu0 0.0
    %88 = vmatpush1.msra.mxu0 0.0
    %89 = vmatprep.subr.mxu0 0.0
    %90 = vmatpush1.msra.mxu0 0.0
    %91 = vmatprep.subr.mxu0 0.0
    %92 = vmatpush1.msra.mxu0 0.0
    %93 = vmatprep.subr.mxu0 0.0
    %94 = vmatpush1.msra.mxu0 0.0
    %95 = vmatprep.subr.mxu0 0.0
    %96 = vmatpush1.msra.mxu0 0.0
    %97 = vmatprep.subr.mxu0 0.0
    %98 = vmatpush1.msra.mxu0 0.0
    %99 = vmatprep.subr.mxu0 0.0
    %100 = vmatpush1.msra.mxu0 0.0
    %101 = vmatprep.subr.mxu0 0.0
    %102 = vmatpush1.msra.mxu0 0.0
    %103 = vmatprep.subr.mxu0 0.0
    %104 = vmatpush1.msra.mxu0 0.0
    %105 = vmatprep.subr.mxu0 0.0
    %106 = vmatpush1.msra.mxu0 0.0
    %107 = vmatprep.subr.mxu0 0.0
    %108 = vmatpush1.msra.mxu0 0.0
    %109 = vmatprep.subr.mxu0 0.0
    %110 = vmatpush1.msra.mxu0 0.0
    %111 = vmatprep.subr.mxu0 0.0
    %112 = vmatpush1.msra.mxu0 0.0
    %113 = vmatprep.subr.mxu0 0.0
    %114 = vmatpush1.msra.mxu0 0.0
    %115 = vmatprep.subr.mxu0 0.0
    %116 = vmatpush1.msra.mxu0 0.0
    %117 = vmatprep.subr.mxu0 0.0
    %118 = vmatpush1.msra.mxu0 0.0
    %119 = vmatprep.subr.mxu0 0.0
    %120 = vmatpush1.msra.mxu0 0.0
    %121 = vmatprep.subr.mxu0 0.0
    %122 = vmatpush1.msra.mxu0 0.0
    %123 = vmatprep.subr.mxu0 0.0
    %124 = vmatpush1.msra.mxu0 0.0
    %125 = vmatprep.subr.mxu0 0.0
    %126 = vmatpush1.msra.mxu0 0.0
    %127 = vmatprep.mubr.f32.mxu0 0.0
    %128 = vmatmul.mubr.f32.gmra.mrb[0].mxu0 %v58
    %v129 = vpop.f32.mrb[0].mxu0
    %v130 = vadd.f32 %v54, %v129
    %v131 = vpop.f32.mrb[0].mxu0
    %132 = vmatprep.mubr.f32.mxu0 0.0
    %133 = vmatmul.mubr.f32.gmra.mrb[0].mxu0 %v61
    %v134 = vpop.f32.mrb[0].mxu0
    %v135 = vadd.f32 %v54, %v134
    %v136 = vpop.f32.mrb[0].mxu0
    %137 = vdwg.mxu0
    %vm138 = vcmask 523264
    %139 = vst.msk [vmem:[#allocation7] sm:$0xff] %vm138, %v130
    %140 = vst.msk [vmem:[#allocation7 + $0x8] sm:$0xff] %vm138, %v135
    // Predicated region
    $region22: #{projection_layer.1} parent=1 // pred_check
      _
    $region23: #{projection_layer.1} parent=1 // pred_check_branch
      %142 = sbr.rel (0) target = $region25
    $region24: #{projection_layer.1} parent=1 // pred_region
      %s144 = ssub.s32 256, 256
      %145 = vsyncadd [#allocation4], %s144
      %s146 = sshll.u32 [#allocation7], 4
      %s147 = int_to_ptr.vmem [resolvable:$true] %s146
      %152 = dma.vmem_to_hbm [thread:$0]  %s147, 256, %s3, [#allocation4], 128, 128, 8
    $region25: #{projection_layer.1} parent=1 // pred_fallthru
      _
    // Predicated region
    $region26: #{projection_layer.1} parent=1 // pred_check
      _
    $region27: #{projection_layer.1} parent=1 // pred_check_branch
      %154 = sbr.rel (0) target = $region29
    $region28: #{projection_layer.1} parent=1 // pred_region
      %155 = dma.done [#allocation4], 256
    $region29: #{projection_layer.1} parent=1 // pred_fallthru
      _
    %156 = vsyncpa [#allocation3], 1
    %157 = vsyncpa [#allocation6], 1
    %158 = vsyncpa [#allocation4], 1

</llo_original>
